<compile_context>
chip_gen: v6e
topology: v6e:2x2x1
jax: 0.10.0
libtpu: 0.0.40
codegen_flags: <defaults>
</compile_context>

<pallas_src>
import jax
import jax.numpy as jnp
from jax.experimental import pallas as pl
from jax.experimental.pallas import tpu as pltpu


# ----------------------------- Pallas kernel -------------------------------

def tanh_rt_kernel(eta_ref, z_ref, o_ref):
    # eta_ref lives in SMEM: 4 scalars (eta0..eta3). Fold e2*e3 once per
    # invocation so the per-element form is e0 + e1*tanh(e3*z - c).
    e0 = eta_ref[0]
    e1 = eta_ref[1]
    e3 = eta_ref[3]
    c = eta_ref[2] * e3
    z = z_ref[...].astype(jnp.float32)
    o_ref[...] = (e0 + e1 * jnp.tanh(e3 * z - c)).astype(o_ref.dtype)


def _choose_tiling(n):
    """Pick a lane-dense 2-D tiling for a flat tensor of n elements.

    Returns (cols, row_blk, rows_padded) — all static Python ints.
    Targets ~1 MiB f32 per block (512 x 512) for large tensors while keeping
    padding small for tiny ones.
    """
    lanes = 128
    cols = 512 if n >= 512 * 8 else lanes            # wide, lane-dense slab
    rows = -(-n // cols)                             # ceil-div
    row_blk = min(512, ((rows + 7) // 8) * 8)        # multiple of 8, <= 512
    rows_padded = -(-rows // row_blk) * row_blk
    return cols, row_blk, rows_padded


def tanh_rt_apply_2d(z2d, eta, row_blk):
    """z2d: (R, C) with R % row_blk == 0, C a multiple of 128. eta: (4,) f32."""
    R, C = z2d.shape
    return pl.pallas_call(
        tanh_rt_kernel,
        out_shape=jax.ShapeDtypeStruct((R, C), z2d.dtype),
        grid_spec=pltpu.PrefetchScalarGridSpec(
            num_scalar_prefetch=0,
            grid=(R // row_blk,),
            in_specs=[
                pl.BlockSpec(memory_space=pltpu.MemorySpace.SMEM),  # eta (4,)
                pl.BlockSpec((row_blk, C), lambda i: (i, 0)),       # z block
            ],
            out_specs=pl.BlockSpec((row_blk, C), lambda i: (i, 0)),
        ),
        compiler_params=pltpu.CompilerParams(
            dimension_semantics=("parallel",)),
    )(eta, z2d)


def _tanh_rt_forward_impl(z_nchw, eta):
    """Elementwise eta[0] + eta[1]*tanh((z - eta[2])*eta[3]) for any shape."""
    shape = z_nchw.shape
    n = 1
    for d in shape:
        n *= d
    cols, row_blk, rows_padded = _choose_tiling(n)
    total = rows_padded * cols

    z_flat = z_nchw.reshape(n)
    if total != n:
        z_flat = jnp.pad(z_flat, (0, total - n))
    z2d = z_flat.reshape(rows_padded, cols)

    o2d = tanh_rt_apply_2d(z2d, eta.astype(jnp.float32), row_blk)
    if total != n:
        return o2d.reshape(total)[:n].reshape(shape)
    return o2d.reshape(shape)


# jit the whole wrapper so the pad / reshape / slice around the pallas_call
# fuse into the same XLA program (shapes are static at trace time).
tanh_rt_forward = jax.jit(_tanh_rt_forward_impl)


# --------------------------- eta computation (glue) -------------------------
# TODO(synk): the real eta_estimator / normalization constants come from
# './utils/act_model_package' (a torch checkpoint we cannot load); a synthetic
# deterministic 9->32->4 MLP with matching normalization semantics is used.

def compute_eta(rt_, X_min, X_max, Y_min, Y_max, Wh, bh, Wo, bo):
    rt_temp = jax.nn.sigmoid(rt_)                        # (6,)
    RTn = jnp.zeros(9, jnp.float32).at[:6].set(rt_temp)  # (9,)
    RT_full = RTn * (X_max - X_min) + X_min              # denormalize
    RT = RT_full[:6]
    R1, R2, W1, L1, W2, L2 = RT[0], RT[1], RT[2], RT[3], RT[4], RT[5]
    k1 = R2 / R1
    k2 = L1 / W1
    k3 = L2 / W2
    RT_extend = jnp.stack([R1, R2, W1, L1, W2, L2, k1, k2, k3])   # (9,)
    RTn_extend = (RT_extend - X_min) / (X_max - X_min)            # (9,)
    # synthetic eta_estimator: 9 -> 32 -> 4, ReLU hidden, sigmoid output
    h = jax.nn.relu(RTn_extend @ Wh + bh)
    eta_n = jax.nn.sigmoid(h @ Wo + bo)                           # (4,)
    eta = eta_n * (Y_max - Y_min) + Y_min
    return eta


# --------------------------------- main -------------------------------------

if __name__ == "__main__":
    key = jax.random.PRNGKey(0)
    k_rt, k_wh, k_wo, k_z = jax.random.split(key, 4)

    # learnable device parameters rt_ = [R1n, R2n, W1n, L1n, W2n, L2n]
    rt_ = jax.random.normal(k_rt, (6,), jnp.float32) * 0.5

    # normalization constants (9-dim for RT_extend, 4-dim for eta) — positive,
    # well-separated so the ratio terms k1/k2/k3 are finite.
    X_min = jnp.array([1.0, 1.0, 0.5, 0.5, 0.5, 0.5, 0.1, 0.1, 0.1], jnp.float32)
    X_max = jnp.array([10.0, 10.0, 5.0, 5.0, 5.0, 5.0, 10.0, 10.0, 10.0], jnp.float32)
    Y_min = jnp.array([-0.1, 0.5, -0.2, 0.5], jnp.float32)
    Y_max = jnp.array([0.1, 1.5, 0.2, 3.0], jnp.float32)

    # synthetic eta_estimator weights (deterministic)
    hid = 32
    Wh = jax.random.normal(k_wh, (9, hid), jnp.float32) * 0.3
    bh = jnp.zeros((hid,), jnp.float32)
    Wo = jax.random.normal(k_wo, (hid, 4), jnp.float32) * 0.3
    bo = jnp.zeros((4,), jnp.float32)

    eta = compute_eta(rt_, X_min, X_max, Y_min, Y_max, Wh, bh, Wo, bo)

    # example input, NCHW like the PyTorch module would receive
    z = jax.random.normal(k_z, (2, 4, 16, 16), jnp.float32)

    out = tanh_rt_forward(z, eta)
    out = jax.block_until_ready(out)

    # correctness check against plain-JAX reference
    ref = eta[0] + eta[1] * jnp.tanh((z - eta[2]) * eta[3])
    assert out.shape == z.shape
    assert jnp.max(jnp.abs(out - ref)) < 1e-5

    # also exercise a non-divisible ("real") activation shape to verify the
    # padded path
    z2 = jax.random.normal(k_z, (3, 5, 7, 11), jnp.float32)
    out2 = jax.block_until_ready(tanh_rt_forward(z2, eta))
    ref2 = eta[0] + eta[1] * jnp.tanh((z2 - eta[2]) * eta[3])
    assert jnp.max(jnp.abs(out2 - ref2)) < 1e-5

    print("KERNEL_OK")
</pallas_src>

<mosaic_0001>
module attributes {stable_mosaic.version = 11 : i64} {
  func.func @tanh_rt_kernel(%arg0: i32, %arg1: memref<4xf32, #tpu.memory_space<smem>>, %arg2: memref<16x128xf32, #tpu.memory_space<vmem>>, %arg3: memref<16x128xf32, #tpu.memory_space<vmem>>) attributes {dimension_semantics = [#tpu.dimension_semantics<parallel>], iteration_bounds = array<i64: 1>, scalar_prefetch = 0 : i64, scratch_operands = 0 : i64, tpu.core_type = #tpu.core_type<tc>, window_params = [{transform_indices = @transform_0, window_bounds = array<i64: 4>}, {transform_indices = @transform_1, window_bounds = array<i64: 16, 128>}, {transform_indices = @transform_2, window_bounds = array<i64: 16, 128>}]} {
    %c0 = arith.constant 0 : index
    %0 = memref.load %arg1[%c0] : memref<4xf32, #tpu.memory_space<smem>>
    %c1 = arith.constant 1 : index
    %1 = memref.load %arg1[%c1] : memref<4xf32, #tpu.memory_space<smem>>
    %c3 = arith.constant 3 : index
    %2 = memref.load %arg1[%c3] : memref<4xf32, #tpu.memory_space<smem>>
    %c2 = arith.constant 2 : index
    %3 = memref.load %arg1[%c2] : memref<4xf32, #tpu.memory_space<smem>>
    %4 = arith.mulf %3, %2 : f32
    %c0_0 = arith.constant 0 : index
    %c0_1 = arith.constant 0 : index
    %5 = vector.load %arg2[%c0_0, %c0_1] : memref<16x128xf32, #tpu.memory_space<vmem>>, vector<16x128xf32>
    %6 = vector.broadcast %2 : f32 to vector<16x128xf32>
    %7 = arith.mulf %6, %5 : vector<16x128xf32>
    %8 = vector.broadcast %4 : f32 to vector<16x128xf32>
    %9 = arith.subf %7, %8 : vector<16x128xf32>
    %10 = math.tanh %9 : vector<16x128xf32>
    %11 = vector.broadcast %1 : f32 to vector<16x128xf32>
    %12 = arith.mulf %11, %10 : vector<16x128xf32>
    %13 = vector.broadcast %0 : f32 to vector<16x128xf32>
    %14 = arith.addf %13, %12 : vector<16x128xf32>
    %c0_2 = arith.constant 0 : index
    %c0_3 = arith.constant 0 : index
    %15 = vector.load %arg3[%c0_2, %c0_3] : memref<16x128xf32, #tpu.memory_space<vmem>>, vector<16x128xf32>
    tpu.vector_store %arg3[%c0_2, %c0_3], %14 {strides = array<i32>} : memref<16x128xf32, #tpu.memory_space<vmem>>, vector<16x128xf32>,
    return
  }
  func.func @transform_0(%arg0: i32) -> i32 {
    %c0_i32 = arith.constant 0 : i32
    %c0_i32_0 = arith.constant 0 : i32
    return %c0_i32 : i32
  }
  func.func @transform_1(%arg0: i32) -> (i32, i32) {
    %c0_i32 = arith.constant 0 : i32
    %c0_i32_0 = arith.constant 0 : i32
    return %arg0, %c0_i32 : i32, i32
  }
  func.func @transform_2(%arg0: i32) -> (i32, i32) {
    %c0_i32 = arith.constant 0 : i32
    %c0_i32_0 = arith.constant 0 : i32
    return %arg0, %c0_i32 : i32, i32
  }
}

</mosaic_0001>

<llo_original>
// kernel: _tanh_rt_forward_impl.1
$region0: #{_tanh_rt_forward_impl.1}
  #allocation0 [shape = 'u32[]', space=smem, size = 0x4, offset = 0x4, fixed_abs, tag = 'smem constant byte address 0x4 - core index']
  #allocation1 [shape = 'u32[144,128]{1,0:T(1,128)}', space=vmem, size = 0x12000, scoped, tag = 'internal scratch']
  %s0 = inlined_call_operand.vmem [shape: f32[4], index: 0, kind: input, shape index: {}]
  %s1 = inlined_call_operand.vmem [shape: f32[16,128], index: 1, kind: input, shape index: {}]
  %s2 = inlined_call_operand.vmem [shape: f32[16,128], index: 2, kind: output, shape index: {}]
  %s3 = sld [smem:[#allocation0]]
  $region22: #{_tanh_rt_forward_impl.1} parent=0
    _
  %s5 = ssub.s32 1, %s3
  %s6 = scalar_select 0, %s5, %s3
  $region1: #{_tanh_rt_forward_impl.1} parent=0
    #allocation2 [shape = 'u8[512]{0}', space=smem, size = 0x200, scoped, tag = 'input window, operand 0, single buffered']
    #allocation3 [shape = 's32[1]{0}', space=sflag, size = 0x4, scoped, tag = 'scoped memory for _tanh_rt_forward_impl.1']
    %7 = vsyncpa [#allocation3], 0
    // Predicated region
    $region2: #{_tanh_rt_forward_impl.1} parent=1 // pred_check
      _
    $region3: #{_tanh_rt_forward_impl.1} parent=1 // pred_check_branch
      %9 = sbr.rel (0) target = $region5
    $region4: #{_tanh_rt_forward_impl.1} parent=1 // pred_region
      %s11 = ssub.s32 16, 16
      %12 = vsyncadd [#allocation3], %s11
      %s14 = sshll.u32 %s0, 4
      %s15 = int_to_ptr.vmem [resolvable:$true] %s14
      %17 = dma.vmem_to_smem %s15, 16, [#allocation2], [#allocation3]
    $region5: #{_tanh_rt_forward_impl.1} parent=1 // pred_fallthru
      _
    // Predicated region
    $region6: #{_tanh_rt_forward_impl.1} parent=1 // pred_check
      _
    $region7: #{_tanh_rt_forward_impl.1} parent=1 // pred_check_branch
      %19 = sbr.rel (0) target = $region9
    $region8: #{_tanh_rt_forward_impl.1} parent=1 // pred_region
      _
    $region9: #{_tanh_rt_forward_impl.1} parent=1 // pred_fallthru
      _
    // Predicated region
    $region10: #{_tanh_rt_forward_impl.1} parent=1 // pred_check
      _
    $region11: #{_tanh_rt_forward_impl.1} parent=1 // pred_check_branch
      %21 = sbr.rel (0) target = $region13
    $region12: #{_tanh_rt_forward_impl.1} parent=1 // pred_region
      %22 = dma.done [#allocation3], 16
    $region13: #{_tanh_rt_forward_impl.1} parent=1 // pred_fallthru
      _
    %23 = sfence
    %s24 = sld [smem:[#allocation2]]
    %s25 = sld [smem:[#allocation2 + $0x1]]
    %s26 = sld [smem:[#allocation2 + $0x3]]
    %s27 = sld [smem:[#allocation2 + $0x2]]
    %s28 = smul.f32 %s27, %s26
    %v29 = vld [vmem:[%s1] sm:$0xff]
    %v30 = vld [vmem:[%s1 + $0x8] sm:$0xff]
    %v31 = vstv %s26
    %v32 = vmul.f32 %v31, %v29
    %v33 = vmul.f32 %v31, %v30
    %v34 = vstv %s28
    %v35 = vsub.f32 %v32, %v34
    %v36 = vsub.f32 %v33, %v34
    %v37 = vtanh.pop %v35
    %v38 = vtanh.pop %v36
    %v39 = vstv %s25
    %v40 = vmul.f32 %v39, %v37
    %v41 = vmul.f32 %v39, %v38
    %v42 = vstv %s24
    %v43 = vadd.f32 %v42, %v40
    %v44 = vadd.f32 %v42, %v41
    %45 = vst [vmem:[%s2] sm:$0xff] %v43
    %46 = vst [vmem:[%s2 + $0x8] sm:$0xff] %v44
    // Predicated region
    $region14: #{_tanh_rt_forward_impl.1} parent=1 // pred_check
      _
    $region15: #{_tanh_rt_forward_impl.1} parent=1 // pred_check_branch
      %48 = sbr.rel (0) target = $region17
    $region16: #{_tanh_rt_forward_impl.1} parent=1 // pred_region
      _
    $region17: #{_tanh_rt_forward_impl.1} parent=1 // pred_fallthru
      _
    // Predicated region
    $region18: #{_tanh_rt_forward_impl.1} parent=1 // pred_check
      _
    $region19: #{_tanh_rt_forward_impl.1} parent=1 // pred_check_branch
      %50 = sbr.rel (0) target = $region21
    $region20: #{_tanh_rt_forward_impl.1} parent=1 // pred_region
      _
    $region21: #{_tanh_rt_forward_impl.1} parent=1 // pred_fallthru
      _
    %51 = vsyncpa [#allocation3], 1

</llo_original>
